<compile_context>
chip_gen: v5e
topology: v5e:2x2
jax: 0.10.0
libtpu: 0.0.40
codegen_flags: <defaults>
</compile_context>

<pallas_src>
import functools

import jax
import jax.numpy as jnp
from jax import lax
from jax.experimental import pallas as pl
from jax.experimental.pallas import tpu as pltpu

_LANE = 128


def _round_up(x, m):
    return (x + m - 1) // m * m


@functools.lru_cache(maxsize=None)
def _vmem_capacity_bytes():
    """Physical VMEM per TensorCore; conservative fallback if query fails."""
    try:
        cap = getattr(pltpu.get_tpu_info(), "vmem_capacity_bytes", None)
        if cap:
            return int(cap)
    except Exception:
        pass
    return 64 << 20   # v7x per-TC size; safe lower bound for v5e/v6e too.


@functools.lru_cache(maxsize=None)
def _tensorcores_per_device():
    """Best-effort TensorCore count per device (megacore); 1 if unknown."""
    try:
        info = pltpu.get_tpu_info()
        for attr in ("num_cores", "cores_per_chip", "tensorcores_per_chip",
                     "num_tensorcores", "core_count"):
            v = getattr(info, attr, None)
            if isinstance(v, int) and 0 < v <= 8:
                return v
    except Exception:
        pass
    try:
        kind = jax.devices()[0].device_kind.lower()
        if any(tag in kind for tag in ("v4", "v5p", "v7")):
            return 2
    except Exception:
        pass
    return 1


def _vmem_limit(estimate_bytes):
    cap = _vmem_capacity_bytes()
    want = int(estimate_bytes + max(4 << 20, estimate_bytes // 8))
    return max(16 << 20, min(want, int(0.9 * cap)))


# ----------------------------------------------------------------------------
# Fused path: single invocation, tiny (L, H, H) weight stack resident in VMEM.
# ----------------------------------------------------------------------------
def _make_fused_kernel(n_layers, n_valid, has_targets, compute_dtype):
    def _layer(cur, w_ref, b_ref, l):
        w = w_ref[l].astype(compute_dtype)          # cast in-kernel (no HBM copy)
        return (jnp.dot(cur.astype(compute_dtype), w,
                        preferred_element_type=jnp.float32)
                + b_ref[l].astype(jnp.float32))

    if has_targets:
        def kernel(x_ref, w_ref, b_ref, y_ref, out_ref, loss_ref):
            cur = x_ref[...].astype(jnp.float32)
            n_pad, h_pad = cur.shape
            row_mask = None
            if n_pad != n_valid:
                # Padded rows would otherwise pollute the loss; padded columns
                # are exactly zero in both out and y, so only rows need a mask.
                row_mask = (lax.broadcasted_iota(jnp.int32, (n_pad, h_pad), 0)
                            < n_valid)
            # Vector loss accumulator: VPU-only adds per layer, one XLU
            # cross-lane reduction at the very end.
            sq_acc = jnp.zeros((n_pad, h_pad), jnp.float32)
            for l in range(n_layers):      # L is small & static: unrolled
                cur = _layer(cur, w_ref, b_ref, l)
                out_ref[l] = cur.astype(out_ref.dtype)
                diff = cur - y_ref[l].astype(jnp.float32)
                if row_mask is not None:
                    diff = jnp.where(row_mask, diff, 0.0)
                sq_acc = sq_acc + diff * diff
            loss_ref[...] = jnp.sum(sq_acc).reshape(1, 1)
        return kernel

    def kernel(x_ref, w_ref, b_ref, out_ref):
        cur = x_ref[...].astype(jnp.float32)
        for l in range(n_layers):
            cur = _layer(cur, w_ref, b_ref, l)
            out_ref[l] = cur.astype(out_ref.dtype)
    return kernel


# ----------------------------------------------------------------------------
# Layered path: grid=(n_tiles, L), one (H, H) weight block streamed per step.
# ----------------------------------------------------------------------------
def _make_layered_kernel(n_valid, has_targets, compute_dtype, tile_n):
    def _load_x(x_hbm, cur_ref, nt):
        start = pl.multiple_of(nt * tile_n, 8)
        pltpu.sync_copy(x_hbm.at[pl.ds(start, tile_n), :], cur_ref)

    def _apply(cur_ref, w_ref, b_ref):
        w = w_ref[0].astype(compute_dtype)          # cast in-kernel
        out = (jnp.dot(cur_ref[...].astype(compute_dtype), w,
                       preferred_element_type=jnp.float32)
               + b_ref[0].astype(jnp.float32))
        cur_ref[...] = out
        return out

    if has_targets:
        def kernel(x_hbm, w_ref, b_ref, y_ref, out_ref, loss_ref,
                   cur_ref, sq_ref):
            nt = pl.program_id(0)
            l = pl.program_id(1)
            n_layers = pl.num_programs(1)

            @pl.when(l == 0)
            def _init():
                _load_x(x_hbm, cur_ref, nt)
                sq_ref[...] = jnp.zeros_like(sq_ref)

            out = _apply(cur_ref, w_ref, b_ref)
            out_ref[0] = out.astype(out_ref.dtype)

            diff = out - y_ref[0].astype(jnp.float32)
            if n_valid is not None:
                row = (lax.broadcasted_iota(jnp.int32, diff.shape, 0)
                       + nt * tile_n)
                diff = jnp.where(row < n_valid, diff, 0.0)
            sq_ref[...] = sq_ref[...] + diff * diff   # VPU-only accumulation

            @pl.when(l == n_layers - 1)
            def _finalize():
                loss_ref[...] = jnp.sum(sq_ref[...]).reshape(1, 1, 1)
        return kernel

    def kernel(x_hbm, w_ref, b_ref, out_ref, cur_ref):
        nt = pl.program_id(0)
        l = pl.program_id(1)

        @pl.when(l == 0)
        def _init():
            _load_x(x_hbm, cur_ref, nt)

        out = _apply(cur_ref, w_ref, b_ref)
        out_ref[0] = out.astype(out_ref.dtype)
    return kernel


# ----------------------------------------------------------------------------
# Wrapper
# ----------------------------------------------------------------------------
@functools.partial(
    jax.jit,
    static_argnames=("has_targets", "force_layered", "force_n_tiles",
                     "compute_dtype_name"))
def _base_srnet_impl(x, weights, biases, y, has_targets, force_layered,
                     force_n_tiles, compute_dtype_name):
    compute_dtype = jnp.dtype(compute_dtype_name)
    L, H, _ = weights.shape
    N = x.shape[0]
    out_dtype = x.dtype

    sub = 16 if compute_dtype.itemsize < 4 else 8      # packed bf16 vreg rows
    Hp = _round_up(max(H, _LANE), _LANE)                # lane-dense last dim
    Np0 = _round_up(max(N, sub), sub)

    w_itemsize = jnp.dtype(weights.dtype).itemsize
    out_itemsize = jnp.dtype(out_dtype).itemsize
    y_itemsize = jnp.dtype(y.dtype).itemsize if has_targets else 0
    c_itemsize = compute_dtype.itemsize
    cap = _vmem_capacity_bytes()
    cores = _tensorcores_per_device()

    # --- fused vs layered: fused only for genuinely tiny weight stacks so no
    #     DMA/compute pipelining is lost; footprint includes temporaries.
    weight_stack_bytes = L * Hp * Hp * w_itemsize
    fused_footprint = (
        Np0 * Hp * 4                              # x (f32)
        + weight_stack_bytes                      # whole weight stack
        + L * Hp * 4                              # biases
        + L * Np0 * Hp * out_itemsize             # outputs
        + L * Np0 * Hp * y_itemsize               # targets
        + 5 * Np0 * Hp * 4                        # cur/diff/sq/cast temporaries
        + Hp * Hp * c_itemsize)                   # in-kernel weight cast copy
    use_fused = (not force_layered
                 and (force_n_tiles is None or force_n_tiles == 1)
                 and weight_stack_bytes <= (2 << 20)
                 and fused_footprint <= cap // 2)

    # --- megacore N-split (layered path; multi-TensorCore chips only).
    n_tiles = 1
    if not use_fused:
        if force_n_tiles is not None:
            n_tiles = max(1, int(force_n_tiles))
        elif cores > 1:
            act_bytes = Np0 * Hp * (out_itemsize + y_itemsize + 4)
            if act_bytes >= 2 * Hp * Hp * w_itemsize and Np0 >= 32 * sub:
                n_tiles = min(int(cores), 2)

    Np = _round_up(max(N, sub), sub * n_tiles)
    tile_n = Np // n_tiles
    ph, pn = Hp - H, Np - N

    # x is tiny: cast once to f32 and streamed by one manual DMA per N-tile.
    xp = x.astype(jnp.float32)
    if pn or ph:
        xp = jnp.pad(xp, ((0, pn), (0, ph)))
    # Weights/biases stream in their stored dtype (no per-call cast copy).
    wp = jnp.pad(weights, ((0, 0), (0, ph), (0, ph))) if ph else weights
    bp = jnp.pad(biases, ((0, 0), (0, 0), (0, ph))) if ph else biases
    yp = None
    if has_targets:
        # TODO(synk): for unaligned H/N this padded copy of y costs one extra
        # HBM read+write; ragged last-tile in-kernel masking would avoid it.
        yp = jnp.pad(y, ((0, 0), (0, pn), (0, ph))) if (pn or ph) else y

    inv_denom = jnp.float32(1.0 / float(N * H * L))
    n_valid = None if Np == N else N

    if use_fused:
        kernel = _make_fused_kernel(L, N, has_targets, compute_dtype)
        vmem = pl.BlockSpec(memory_space=pltpu.MemorySpace.VMEM)
        params = pltpu.CompilerParams(
            vmem_limit_bytes=_vmem_limit(fused_footprint))
        if has_targets:
            outs_p, sq = pl.pallas_call(
                kernel,
                out_shape=(jax.ShapeDtypeStruct((L, Np, Hp), out_dtype),
                           jax.ShapeDtypeStruct((1, 1), jnp.float32)),
                in_specs=[vmem, vmem, vmem, vmem],
                out_specs=(vmem, vmem),
                compiler_params=params,
            )(xp, wp, bp, yp)
            loss = sq[0, 0] * inv_denom
        else:
            outs_p = pl.pallas_call(
                kernel,
                out_shape=jax.ShapeDtypeStruct((L, Np, Hp), out_dtype),
                in_specs=[vmem, vmem, vmem],
                out_specs=vmem,
                compiler_params=params,
            )(xp, wp, bp)
            loss = None
    else:
        kernel = _make_layered_kernel(n_valid, has_targets, compute_dtype,
                                      tile_n)
        # x is NOT a pipelined input: raw HBM ref + one sync_copy at l == 0.
        x_spec = pl.BlockSpec(memory_space=pl.ANY)
        w_spec = pl.BlockSpec((1, Hp, Hp), lambda n, l: (l, 0, 0))
        b_spec = pl.BlockSpec((1, 1, Hp), lambda n, l: (l, 0, 0))
        out_spec = pl.BlockSpec((1, tile_n, Hp), lambda n, l: (l, n, 0))

        per_step = (2 * Hp * Hp * w_itemsize            # dbl-buffered weights
                    + Hp * Hp * c_itemsize              # in-kernel cast copy
                    + 2 * Hp * jnp.dtype(biases.dtype).itemsize
                    + 2 * tile_n * Hp * out_itemsize    # output block
                    + tile_n * Hp * 4                   # carried activation
                    + 3 * tile_n * Hp * 4)              # f32/cast/diff temps
        scratch = [pltpu.VMEM((tile_n, Hp), jnp.float32)]
        sems = ("parallel", "arbitrary")                # layers sequential

        # TODO(synk): add output-column tiling of the weight block once
        # 2*Hp*Hp*w_itemsize approaches the VMEM capacity (large H).
        if has_targets:
            per_step += 2 * tile_n * Hp * y_itemsize + tile_n * Hp * 4
            scratch.append(pltpu.VMEM((tile_n, Hp), jnp.float32))
            y_spec = pl.BlockSpec((1, tile_n, Hp), lambda n, l: (l, n, 0))
            loss_spec = pl.BlockSpec((1, 1, 1), lambda n, l: (n, 0, 0))
            grid_spec = pltpu.PrefetchScalarGridSpec(
                num_scalar_prefetch=0, grid=(n_tiles, L),
                in_specs=[x_spec, w_spec, b_spec, y_spec],
                out_specs=(out_spec, loss_spec),
                scratch_shapes=scratch)
            outs_p, sq = pl.pallas_call(
                kernel,
                out_shape=(jax.ShapeDtypeStruct((L, Np, Hp), out_dtype),
                           jax.ShapeDtypeStruct((n_tiles, 1, 1), jnp.float32)),
                grid_spec=grid_spec,
                compiler_params=pltpu.CompilerParams(
                    dimension_semantics=sems,
                    vmem_limit_bytes=_vmem_limit(per_step)),
            )(xp, wp, bp, yp)
            loss = jnp.sum(sq) * inv_denom
        else:
            grid_spec = pltpu.PrefetchScalarGridSpec(
                num_scalar_prefetch=0, grid=(n_tiles, L),
                in_specs=[x_spec, w_spec, b_spec],
                out_specs=out_spec,
                scratch_shapes=scratch)
            outs_p = pl.pallas_call(
                kernel,
                out_shape=jax.ShapeDtypeStruct((L, Np, Hp), out_dtype),
                grid_spec=grid_spec,
                compiler_params=pltpu.CompilerParams(
                    dimension_semantics=sems,
                    vmem_limit_bytes=_vmem_limit(per_step)),
            )(xp, wp, bp)
            loss = None

    outs = outs_p[:, :N, :H]
    return outs, loss


def base_srnet_forward(x, weights, biases, y=None, *,
                       compute_dtype=jnp.bfloat16, force_layered=False,
                       force_n_tiles=None):
    """Mirror of BaseSRNet.forward.

    Returns stacked per-layer outputs (L, N, H), or (loss, outputs) if y is
    given.  `compute_dtype` is the MXU input dtype (accumulation is f32);
    weights are cast in-kernel, so pass pre-cast bf16 weights to also halve
    the weight HBM stream, or jnp.float32 for full-precision math.
    """
    has_targets = y is not None
    outs, loss = _base_srnet_impl(
        x, weights, biases, y, has_targets, bool(force_layered),
        force_n_tiles, jnp.dtype(compute_dtype).name)
    if not has_targets:
        return outs
    return loss, outs


def _reference(x, weights, biases, y, compute_dtype):
    """Plain-JAX reference (same compute_dtype semantics as the kernel)."""
    cur = x.astype(jnp.float32)
    outs = []
    for l in range(weights.shape[0]):
        cur = (jnp.dot(cur.astype(compute_dtype),
                       weights[l].astype(compute_dtype),
                       preferred_element_type=jnp.float32)
               + biases[l].astype(jnp.float32))
        outs.append(cur)
    outs = jnp.stack(outs, axis=0)
    if y is None:
        return None, outs
    loss = jnp.mean((outs - y.astype(jnp.float32)) ** 2)
    return loss, outs


if __name__ == "__main__":
    def _check(a, b, tol, msg):
        a = jnp.asarray(a, jnp.float32)
        b = jnp.asarray(b, jnp.float32)
        assert jnp.allclose(a, b, atol=tol, rtol=tol), msg

    # --- Small shapes: fused single-invocation path, bf16 compute (default).
    L, N, H = 3, 8, 32
    key = jax.random.PRNGKey(0)
    kx, kw, kb, ky = jax.random.split(key, 4)
    x = jax.random.normal(kx, (N, H), dtype=jnp.float32)
    weights = jax.random.normal(kw, (L, H, H), dtype=jnp.float32) * (H ** -0.5)
    biases = jax.random.normal(kb, (L, 1, H), dtype=jnp.float32) * 0.1
    y = jax.random.normal(ky, (L, N, H), dtype=jnp.float32)

    outs_only = base_srnet_forward(x, weights, biases)          # y=None branch
    jax.block_until_ready(outs_only)
    loss, outs = base_srnet_forward(x, weights, biases, y)      # loss branch
    jax.block_until_ready((loss, outs))
    ref_loss, ref_outs = _reference(x, weights, biases, y, jnp.bfloat16)
    _check(outs, ref_outs, 2e-2, "fused bf16 outputs mismatch")
    _check(loss, ref_loss, 2e-2, "fused bf16 loss mismatch")
    _check(outs_only, ref_outs, 2e-2, "fused bf16 outputs (y=None) mismatch")

    # --- Layered weight-streaming path, f32 compute.
    loss32, outs32 = base_srnet_forward(
        x, weights, biases, y, compute_dtype=jnp.float32, force_layered=True)
    outs32_only = base_srnet_forward(
        x, weights, biases, compute_dtype=jnp.float32, force_layered=True)
    jax.block_until_ready((loss32, outs32, outs32_only))
    ref_loss32, ref_outs32 = _reference(x, weights, biases, y, jnp.float32)
    _check(outs32, ref_outs32, 1e-2, "layered f32 outputs mismatch")
    _check(loss32, ref_loss32, 1e-2, "layered f32 loss mismatch")
    _check(outs32_only, ref_outs32, 1e-2, "layered f32 outputs (y=None) mismatch")

    # --- Layered path with a forced megacore-style N-split (2 tiles).
    L3, N3, H3 = 3, 16, 128
    k3 = jax.random.split(jax.random.PRNGKey(2), 4)
    x3 = jax.random.normal(k3[0], (N3, H3), dtype=jnp.float32)
    w3 = jax.random.normal(k3[1], (L3, H3, H3), dtype=jnp.float32) * (H3 ** -0.5)
    b3 = jax.random.normal(k3[2], (L3, 1, H3), dtype=jnp.float32) * 0.1
    y3 = jax.random.normal(k3[3], (L3, N3, H3), dtype=jnp.float32)
    loss3, outs3 = base_srnet_forward(
        x3, w3, b3, y3, compute_dtype=jnp.float32, force_n_tiles=2)
    jax.block_until_ready((loss3, outs3))
    ref_loss3, ref_outs3 = _reference(x3, w3, b3, y3, jnp.float32)
    _check(outs3, ref_outs3, 1e-2, "n-split f32 outputs mismatch")
    _check(loss3, ref_loss3, 1e-2, "n-split f32 loss mismatch")
    # Same split with bf16 compute: Np pads 16 -> 32, exercising row masking.
    loss3b, outs3b = base_srnet_forward(x3, w3, b3, y3, force_n_tiles=2)
    jax.block_until_ready((loss3b, outs3b))
    ref_loss3b, ref_outs3b = _reference(x3, w3, b3, y3, jnp.bfloat16)
    _check(outs3b, ref_outs3b, 2e-2, "n-split bf16 outputs mismatch")
    _check(loss3b, ref_loss3b, 2e-2, "n-split bf16 loss mismatch")

    # --- Non-aligned shapes: H/N padding + loss row-masking, both paths.
    L2, N2, H2 = 2, 6, 20
    k2 = jax.random.split(jax.random.PRNGKey(1), 4)
    x2 = jax.random.normal(k2[0], (N2, H2), dtype=jnp.float32)
    w2 = jax.random.normal(k2[1], (L2, H2, H2), dtype=jnp.float32) * (H2 ** -0.5)
    b2 = jax.random.normal(k2[2], (L2, 1, H2), dtype=jnp.float32) * 0.1
    y2 = jax.random.normal(k2[3], (L2, N2, H2), dtype=jnp.float32)
    loss2, outs2 = base_srnet_forward(x2, w2, b2, y2)
    loss2l, outs2l = base_srnet_forward(x2, w2, b2, y2, force_layered=True)
    jax.block_until_ready((loss2, outs2, loss2l, outs2l))
    ref_loss2, ref_outs2 = _reference(x2, w2, b2, y2, jnp.bfloat16)
    _check(outs2, ref_outs2, 2e-2, "padded fused outputs mismatch")
    _check(loss2, ref_loss2, 2e-2, "padded fused loss mismatch")
    _check(outs2l, ref_outs2, 2e-2, "padded layered outputs mismatch")
    _check(loss2l, ref_loss2, 2e-2, "padded layered loss mismatch")

    print("KERNEL_OK")
</pallas_src>

<mosaic_0001>
module attributes {stable_mosaic.version = 11 : i64} {
  func.func @kernel(%arg0: memref<16x128xf32, #tpu.memory_space<vmem>>, %arg1: memref<3x128x128xf32, #tpu.memory_space<vmem>>, %arg2: memref<3x1x128xf32, #tpu.memory_space<vmem>>, %arg3: memref<3x16x128xf32, #tpu.memory_space<vmem>>) attributes {dimension_semantics = [], scalar_prefetch = 0 : i64, scratch_operands = 0 : i64, tpu.core_type = #tpu.core_type<tc>} {
    %c0 = arith.constant 0 : index
    %c0_0 = arith.constant 0 : index
    %0 = vector.load %arg0[%c0, %c0_0] : memref<16x128xf32, #tpu.memory_space<vmem>>, vector<16x128xf32>
    %c0_1 = arith.constant 0 : index
    %c0_2 = arith.constant 0 : index
    %c0_3 = arith.constant 0 : index
    %1 = vector.load %arg1[%c0_1, %c0_2, %c0_3] : memref<3x128x128xf32, #tpu.memory_space<vmem>>, vector<1x128x128xf32>
    %2 = vector.shape_cast %1 : vector<1x128x128xf32> to vector<128x128xf32>
    %3 = arith.truncf %2 : vector<128x128xf32> to vector<128x128xbf16>
    %4 = arith.truncf %0 : vector<16x128xf32> to vector<16x128xbf16>
    %cst = arith.constant dense<0.000000e+00> : vector<16x128xf32>
    %5 = tpu.matmul %4, %3, %cst {dimension_numbers = #tpu.dot_dimension_numbers<[1], [0], [0], [1], [0, 0, 1, 1], [], []>} : vector<16x128xbf16>, vector<128x128xbf16>, vector<16x128xf32> -> vector<16x128xf32>
    %c0_4 = arith.constant 0 : index
    %c0_5 = arith.constant 0 : index
    %c0_6 = arith.constant 0 : index
    %6 = vector.load %arg2[%c0_4, %c0_5, %c0_6] : memref<3x1x128xf32, #tpu.memory_space<vmem>>, vector<1x1x128xf32>
    %7 = vector.shape_cast %6 : vector<1x1x128xf32> to vector<1x128xf32>
    %8 = vector.broadcast %7 : vector<1x128xf32> to vector<16x128xf32>
    %9 = arith.addf %5, %8 : vector<16x128xf32>
    %c0_7 = arith.constant 0 : index
    %c0_8 = arith.constant 0 : index
    %c0_9 = arith.constant 0 : index
    %10 = vector.load %arg3[%c0_7, %c0_8, %c0_9] : memref<3x16x128xf32, #tpu.memory_space<vmem>>, vector<1x16x128xf32>
    %11 = vector.shape_cast %10 : vector<1x16x128xf32> to vector<16x128xf32>
    %12 = vector.shape_cast %9 : vector<16x128xf32> to vector<1x16x128xf32>
    tpu.vector_store %arg3[%c0_7, %c0_8, %c0_9], %12 {strides = array<i32>} : memref<3x16x128xf32, #tpu.memory_space<vmem>>, vector<1x16x128xf32>,
    %c1 = arith.constant 1 : index
    %c0_10 = arith.constant 0 : index
    %c0_11 = arith.constant 0 : index
    %13 = vector.load %arg1[%c1, %c0_10, %c0_11] : memref<3x128x128xf32, #tpu.memory_space<vmem>>, vector<1x128x128xf32>
    %14 = vector.shape_cast %13 : vector<1x128x128xf32> to vector<128x128xf32>
    %15 = arith.truncf %14 : vector<128x128xf32> to vector<128x128xbf16>
    %16 = arith.truncf %9 : vector<16x128xf32> to vector<16x128xbf16>
    %cst_12 = arith.constant dense<0.000000e+00> : vector<16x128xf32>
    %17 = tpu.matmul %16, %15, %cst_12 {dimension_numbers = #tpu.dot_dimension_numbers<[1], [0], [0], [1], [0, 0, 1, 1], [], []>} : vector<16x128xbf16>, vector<128x128xbf16>, vector<16x128xf32> -> vector<16x128xf32>
    %c1_13 = arith.constant 1 : index
    %c0_14 = arith.constant 0 : index
    %c0_15 = arith.constant 0 : index
    %18 = vector.load %arg2[%c1_13, %c0_14, %c0_15] : memref<3x1x128xf32, #tpu.memory_space<vmem>>, vector<1x1x128xf32>
    %19 = vector.shape_cast %18 : vector<1x1x128xf32> to vector<1x128xf32>
    %20 = vector.broadcast %19 : vector<1x128xf32> to vector<16x128xf32>
    %21 = arith.addf %17, %20 : vector<16x128xf32>
    %c1_16 = arith.constant 1 : index
    %c0_17 = arith.constant 0 : index
    %c0_18 = arith.constant 0 : index
    %22 = vector.load %arg3[%c1_16, %c0_17, %c0_18] : memref<3x16x128xf32, #tpu.memory_space<vmem>>, vector<1x16x128xf32>
    %23 = vector.shape_cast %22 : vector<1x16x128xf32> to vector<16x128xf32>
    %24 = vector.shape_cast %21 : vector<16x128xf32> to vector<1x16x128xf32>
    tpu.vector_store %arg3[%c1_16, %c0_17, %c0_18], %24 {strides = array<i32>} : memref<3x16x128xf32, #tpu.memory_space<vmem>>, vector<1x16x128xf32>,
    %c2 = arith.constant 2 : index
    %c0_19 = arith.constant 0 : index
    %c0_20 = arith.constant 0 : index
    %25 = vector.load %arg1[%c2, %c0_19, %c0_20] : memref<3x128x128xf32, #tpu.memory_space<vmem>>, vector<1x128x128xf32>
    %26 = vector.shape_cast %25 : vector<1x128x128xf32> to vector<128x128xf32>
    %27 = arith.truncf %26 : vector<128x128xf32> to vector<128x128xbf16>
    %28 = arith.truncf %21 : vector<16x128xf32> to vector<16x128xbf16>
    %cst_21 = arith.constant dense<0.000000e+00> : vector<16x128xf32>
    %29 = tpu.matmul %28, %27, %cst_21 {dimension_numbers = #tpu.dot_dimension_numbers<[1], [0], [0], [1], [0, 0, 1, 1], [], []>} : vector<16x128xbf16>, vector<128x128xbf16>, vector<16x128xf32> -> vector<16x128xf32>
    %c2_22 = arith.constant 2 : index
    %c0_23 = arith.constant 0 : index
    %c0_24 = arith.constant 0 : index
    %30 = vector.load %arg2[%c2_22, %c0_23, %c0_24] : memref<3x1x128xf32, #tpu.memory_space<vmem>>, vector<1x1x128xf32>
    %31 = vector.shape_cast %30 : vector<1x1x128xf32> to vector<1x128xf32>
    %32 = vector.broadcast %31 : vector<1x128xf32> to vector<16x128xf32>
    %33 = arith.addf %29, %32 : vector<16x128xf32>
    %c2_25 = arith.constant 2 : index
    %c0_26 = arith.constant 0 : index
    %c0_27 = arith.constant 0 : index
    %34 = vector.load %arg3[%c2_25, %c0_26, %c0_27] : memref<3x16x128xf32, #tpu.memory_space<vmem>>, vector<1x16x128xf32>
    %35 = vector.shape_cast %34 : vector<1x16x128xf32> to vector<16x128xf32>
    %36 = vector.shape_cast %33 : vector<16x128xf32> to vector<1x16x128xf32>
    tpu.vector_store %arg3[%c2_25, %c0_26, %c0_27], %36 {strides = array<i32>} : memref<3x16x128xf32, #tpu.memory_space<vmem>>, vector<1x16x128xf32>,
    return
  }
}

</mosaic_0001>

<llo_original>
// kernel: _base_srnet_impl.1
$region0: #{_base_srnet_impl.1}
  #allocation0 [shape = 'u32[]', space=smem, size = 0x4, offset = 0x4, fixed_abs, tag = 'smem constant byte address 0x4 - core index']
  #allocation1 [shape = 'u32[72,128]{1,0:T(1,128)}', space=vmem, size = 0x9000, scoped, tag = 'internal scratch']
  %s0 = inlined_call_operand.vmem [shape: f32[16,128], index: 0, kind: input, shape index: {}]
  %s1 = inlined_call_operand.vmem [shape: f32[3,128,128], index: 1, kind: input, shape index: {}]
  %s2 = inlined_call_operand.vmem [shape: f32[3,1,128], index: 2, kind: input, shape index: {}]
  %s3 = inlined_call_operand.vmem [shape: f32[3,16,128], index: 3, kind: output, shape index: {}]
  %s4 = sld [smem:[#allocation0]]
  $region22: #{_base_srnet_impl.1} parent=0
    _
  %s6 = ssub.s32 1, %s4
  %s7 = scalar_select 0, %s6, %s4
  // Predicated region
  $region2: #{_base_srnet_impl.1} parent=0 // pred_check
    _
  $region3: #{_base_srnet_impl.1} parent=0 // pred_check_branch
    %9 = sbr.rel (0) target = $region5
  $region4: #{_base_srnet_impl.1} parent=0 // pred_region
    _
  $region5: #{_base_srnet_impl.1} parent=0 // pred_fallthru
    _
  // Predicated region
  $region6: #{_base_srnet_impl.1} parent=0 // pred_check
    _
  $region7: #{_base_srnet_impl.1} parent=0 // pred_check_branch
    %11 = sbr.rel (0) target = $region9
  $region8: #{_base_srnet_impl.1} parent=0 // pred_region
    _
  $region9: #{_base_srnet_impl.1} parent=0 // pred_fallthru
    _
  // Predicated region
  $region10: #{_base_srnet_impl.1} parent=0 // pred_check
    _
  $region11: #{_base_srnet_impl.1} parent=0 // pred_check_branch
    %13 = sbr.rel (0) target = $region13
  $region12: #{_base_srnet_impl.1} parent=0 // pred_region
    _
  $region13: #{_base_srnet_impl.1} parent=0 // pred_fallthru
    _
  %v14 = vld [vmem:[%s0] sm:$0xff]
  %v15 = vld [vmem:[%s0 + $0x8] sm:$0xff]
  %v16 = vld [vmem:[%s1] sm:$0xff]
  %v17 = vld [vmem:[%s1 + $0x8] sm:$0xff]
  %v18 = vld [vmem:[%s1 + $0x10] sm:$0xff]
  %v19 = vld [vmem:[%s1 + $0x18] sm:$0xff]
  %v20 = vld [vmem:[%s1 + $0x20] sm:$0xff]
  %v21 = vld [vmem:[%s1 + $0x28] sm:$0xff]
  %v22 = vld [vmem:[%s1 + $0x30] sm:$0xff]
  %v23 = vld [vmem:[%s1 + $0x38] sm:$0xff]
  %v24 = vld [vmem:[%s1 + $0x40] sm:$0xff]
  %v25 = vld [vmem:[%s1 + $0x48] sm:$0xff]
  %v26 = vld [vmem:[%s1 + $0x50] sm:$0xff]
  %v27 = vld [vmem:[%s1 + $0x58] sm:$0xff]
  %v28 = vld [vmem:[%s1 + $0x60] sm:$0xff]
  %v29 = vld [vmem:[%s1 + $0x68] sm:$0xff]
  %v30 = vld [vmem:[%s1 + $0x70] sm:$0xff]
  %v31 = vld [vmem:[%s1 + $0x78] sm:$0xff]
  %v32 = vpack.c.bf16 %v17, %v16
  %v33 = vpack.c.bf16 %v19, %v18
  %v34 = vpack.c.bf16 %v21, %v20
  %v35 = vpack.c.bf16 %v23, %v22
  %v36 = vpack.c.bf16 %v25, %v24
  %v37 = vpack.c.bf16 %v27, %v26
  %v38 = vpack.c.bf16 %v29, %v28
  %v39 = vpack.c.bf16 %v31, %v30
  %v40 = vpack.c.bf16 %v15, %v14
  %v41 = vld [vmem:[%s2] sm:$0x1]
  %v43 = vperm.slane %v41, 0
  %45 = vmatpush.bf16.msra.mxu0 %v39
  %46 = vmatpush.bf16.msra.mxu0 %v38
  %47 = vmatpush.bf16.msra.mxu0 %v37
  %48 = vmatpush.bf16.msra.mxu0 %v36
  %49 = vmatpush.bf16.msra.mxu0 %v35
  %50 = vmatpush.bf16.msra.mxu0 %v34
  %51 = vmatpush.bf16.msra.mxu0 %v33
  %52 = vmatpush.bf16.msra.mxu0 %v32
  %53 = vmatmul.bf16.gmra.mxu0 %v40
  %v54 = vpop.f32.mrf.mxu0
  %v55 = vadd.f32 %v43, %v54
  %v56 = vpop.f32.mrf.mxu0
  %v57 = vadd.f32 %v43, %v56
  %58 = vdwg.mxu0
  %59 = vst [vmem:[%s3] sm:$0xff] %v55
  %60 = vst [vmem:[%s3 + $0x8] sm:$0xff] %v57
  %s61 = scalar_lea.vmem %s1, 128
  %v62 = vld [vmem:[%s61] sm:$0xff]
  %v63 = vld [vmem:[%s61 + $0x8] sm:$0xff]
  %v64 = vld [vmem:[%s61 + $0x10] sm:$0xff]
  %v65 = vld [vmem:[%s61 + $0x18] sm:$0xff]
  %v66 = vld [vmem:[%s61 + $0x20] sm:$0xff]
  %v67 = vld [vmem:[%s61 + $0x28] sm:$0xff]
  %v68 = vld [vmem:[%s61 + $0x30] sm:$0xff]
  %v69 = vld [vmem:[%s61 + $0x38] sm:$0xff]
  %v70 = vld [vmem:[%s61 + $0x40] sm:$0xff]
  %v71 = vld [vmem:[%s61 + $0x48] sm:$0xff]
  %v72 = vld [vmem:[%s61 + $0x50] sm:$0xff]
  %v73 = vld [vmem:[%s61 + $0x58] sm:$0xff]
  %v74 = vld [vmem:[%s61 + $0x60] sm:$0xff]
  %v75 = vld [vmem:[%s61 + $0x68] sm:$0xff]
  %v76 = vld [vmem:[%s61 + $0x70] sm:$0xff]
  %v77 = vld [vmem:[%s61 + $0x78] sm:$0xff]
  %v78 = vpack.c.bf16 %v63, %v62
  %v79 = vpack.c.bf16 %v65, %v64
  %v80 = vpack.c.bf16 %v67, %v66
  %v81 = vpack.c.bf16 %v69, %v68
  %v82 = vpack.c.bf16 %v71, %v70
  %v83 = vpack.c.bf16 %v73, %v72
  %v84 = vpack.c.bf16 %v75, %v74
  %v85 = vpack.c.bf16 %v77, %v76
  %v86 = vpack.c.bf16 %v57, %v55
  %s87 = scalar_lea.vmem %s2, 1
  %v88 = vld [vmem:[%s87] sm:$0x1]
  %v90 = vperm.slane %v88, 0
  %92 = vmatpush.bf16.msra.mxu0 %v85
  %93 = vmatpush.bf16.msra.mxu0 %v84
  %94 = vmatpush.bf16.msra.mxu0 %v83
  %95 = vmatpush.bf16.msra.mxu0 %v82
  %96 = vmatpush.bf16.msra.mxu0 %v81
  %97 = vmatpush.bf16.msra.mxu0 %v80
  %98 = vmatpush.bf16.msra.mxu0 %v79
  %99 = vmatpush.bf16.msra.mxu0 %v78
  %100 = vmatmul.bf16.gmra.mxu0 %v86
  %v101 = vpop.f32.mrf.mxu0
  %v102 = vadd.f32 %v90, %v101
  %v103 = vpop.f32.mrf.mxu0
  %v104 = vadd.f32 %v90, %v103
  %105 = vdwg.mxu0
  %s106 = scalar_lea.vmem %s3, 16
  %107 = vst [vmem:[%s106] sm:$0xff] %v102
  %108 = vst [vmem:[%s106 + $0x8] sm:$0xff] %v104
  %s109 = scalar_lea.vmem %s1, 256
  %v110 = vld [vmem:[%s109] sm:$0xff]
  %v111 = vld [vmem:[%s109 + $0x8] sm:$0xff]
  %v112 = vld [vmem:[%s109 + $0x10] sm:$0xff]
  %v113 = vld [vmem:[%s109 + $0x18] sm:$0xff]
  %v114 = vld [vmem:[%s109 + $0x20] sm:$0xff]
  %v115 = vld [vmem:[%s109 + $0x28] sm:$0xff]
  %v116 = vld [vmem:[%s109 + $0x30] sm:$0xff]
  %v117 = vld [vmem:[%s109 + $0x38] sm:$0xff]
  %v118 = vld [vmem:[%s109 + $0x40] sm:$0xff]
  %v119 = vld [vmem:[%s109 + $0x48] sm:$0xff]
  %v120 = vld [vmem:[%s109 + $0x50] sm:$0xff]
  %v121 = vld [vmem:[%s109 + $0x58] sm:$0xff]
  %v122 = vld [vmem:[%s109 + $0x60] sm:$0xff]
  %v123 = vld [vmem:[%s109 + $0x68] sm:$0xff]
  %v124 = vld [vmem:[%s109 + $0x70] sm:$0xff]
  %v125 = vld [vmem:[%s109 + $0x78] sm:$0xff]
  %v126 = vpack.c.bf16 %v111, %v110
  %v127 = vpack.c.bf16 %v113, %v112
  %v128 = vpack.c.bf16 %v115, %v114
  %v129 = vpack.c.bf16 %v117, %v116
  %v130 = vpack.c.bf16 %v119, %v118
  %v131 = vpack.c.bf16 %v121, %v120
  %v132 = vpack.c.bf16 %v123, %v122
  %v133 = vpack.c.bf16 %v125, %v124
  %v134 = vpack.c.bf16 %v104, %v102
  %s135 = scalar_lea.vmem %s2, 2
  %v136 = vld [vmem:[%s135] sm:$0x1]
  %v138 = vperm.slane %v136, 0
  %140 = vmatpush.bf16.msra.mxu0 %v133
  %141 = vmatpush.bf16.msra.mxu0 %v132
  %142 = vmatpush.bf16.msra.mxu0 %v131
  %143 = vmatpush.bf16.msra.mxu0 %v130
  %144 = vmatpush.bf16.msra.mxu0 %v129
  %145 = vmatpush.bf16.msra.mxu0 %v128
  %146 = vmatpush.bf16.msra.mxu0 %v127
  %147 = vmatpush.bf16.msra.mxu0 %v126
  %148 = vmatmul.bf16.gmra.mxu0 %v134
  %v149 = vpop.f32.mrf.mxu0
  %v150 = vadd.f32 %v138, %v149
  %v151 = vpop.f32.mrf.mxu0
  %v152 = vadd.f32 %v138, %v151
  %153 = vdwg.mxu0
  %s154 = scalar_lea.vmem %s3, 32
  %155 = vst [vmem:[%s154] sm:$0xff] %v150
  %156 = vst [vmem:[%s154 + $0x8] sm:$0xff] %v152
  // Predicated region
  $region14: #{_base_srnet_impl.1} parent=0 // pred_check
    _
  $region15: #{_base_srnet_impl.1} parent=0 // pred_check_branch
    %158 = sbr.rel (0) target = $region17
  $region16: #{_base_srnet_impl.1} parent=0 // pred_region
    _
  $region17: #{_base_srnet_impl.1} parent=0 // pred_fallthru
    _
  // Predicated region
  $region18: #{_base_srnet_impl.1} parent=0 // pred_check
    _
  $region19: #{_base_srnet_impl.1} parent=0 // pred_check_branch
    %160 = sbr.rel (0) target = $region21
  $region20: #{_base_srnet_impl.1} parent=0 // pred_region
    _
  $region21: #{_base_srnet_impl.1} parent=0 // pred_fallthru
    _

</llo_original>
